<compile_context>
chip_gen: v6e
topology: v6e:2x2x1
jax: 0.10.0
libtpu: 0.0.40
codegen_flags: <defaults>
</compile_context>

<pallas_src>
import functools

import jax
import jax.numpy as jnp
from jax.experimental import pallas as pl
from jax.experimental.pallas import tpu as pltpu

BN_EPS = 1e-5


def _round_up(x, m):
    return (x + m - 1) // m * m


# ----------------------------------------------------------------------------
# Fused matmul + BatchNorm(+residual)(+ReLU) kernels (the conv hot path)
# ----------------------------------------------------------------------------
def _mm_bn_kernel(a_ref, b_ref, s_ref, c_ref, o_ref, *, relu):
    acc = jnp.dot(a_ref[...], b_ref[...], preferred_element_type=jnp.float32)
    y = acc * s_ref[...] + c_ref[...]
    if relu:
        y = jnp.maximum(y, 0.0)
    o_ref[...] = y.astype(o_ref.dtype)


def _mm_bn_res_kernel(a_ref, b_ref, s_ref, c_ref, r_ref, o_ref, *, relu):
    acc = jnp.dot(a_ref[...], b_ref[...], preferred_element_type=jnp.float32)
    y = acc * s_ref[...] + c_ref[...] + r_ref[...].astype(jnp.float32)
    if relu:
        y = jnp.maximum(y, 0.0)
    o_ref[...] = y.astype(o_ref.dtype)


def _m_tiling(M):
    """Pick (padded_M, tile_m). N and K are never padded (full-dim blocks)."""
    if M % 256 == 0 and M >= 512:          # >=2 parallel M blocks (v7x dual-TC)
        return M, 256
    if M % 128 == 0 and M >= 256:
        return M, 128
    if M <= 256:                            # small layer: single block, pad to 16
        Mp = _round_up(M, 16)
        return Mp, Mp
    Mp = _round_up(M, 128)
    return Mp, 128


def matmul_bn(a, w, scale, bias, residual=None, relu=True):
    """(M,K)bf16 @ (K,Cout)bf16 -> bf16, with fused BN scale/bias(+res)(+ReLU)."""
    M, K = a.shape
    Kw, Nc = w.shape
    assert K == Kw
    Mp, tm = _m_tiling(M)
    if Mp != M:
        a = jnp.pad(a, ((0, Mp - M), (0, 0)))
        if residual is not None:
            residual = jnp.pad(residual, ((0, Mp - M), (0, 0)))

    a_spec = pl.BlockSpec((tm, K), lambda i: (i, 0))
    w_spec = pl.BlockSpec((K, Nc), lambda i: (0, 0))
    v_spec = pl.BlockSpec((1, Nc), lambda i: (0, 0))
    o_spec = pl.BlockSpec((tm, Nc), lambda i: (i, 0))

    if residual is None:
        kern = functools.partial(_mm_bn_kernel, relu=relu)
        in_specs = [a_spec, w_spec, v_spec, v_spec]
        args = (a, w, scale, bias)
    else:
        kern = functools.partial(_mm_bn_res_kernel, relu=relu)
        in_specs = [a_spec, w_spec, v_spec, v_spec, o_spec]
        args = (a, w, scale, bias, residual)

    out = pl.pallas_call(
        kern,
        out_shape=jax.ShapeDtypeStruct((Mp, Nc), jnp.bfloat16),
        grid_spec=pltpu.PrefetchScalarGridSpec(
            num_scalar_prefetch=0,
            grid=(Mp // tm,),
            in_specs=in_specs,
            out_specs=o_spec),
        compiler_params=pltpu.CompilerParams(
            dimension_semantics=("parallel",)),
    )(*args)
    return out if Mp == M else out[:M]


# ----------------------------------------------------------------------------
# Max-pool (3x3 / stride 2): gridded 9-tap elementwise max, lane-dense channels
# ----------------------------------------------------------------------------
def _maxpool_kernel(*refs):
    out_ref = refs[-1]
    taps = refs[:-1]
    acc = taps[0][...].astype(jnp.float32)        # f32 compare (v5e: no bf16 VPU)
    for t in taps[1:]:
        acc = jnp.maximum(acc, t[...].astype(jnp.float32))
    out_ref[...] = acc.astype(out_ref.dtype)


def maxpool2d(x, k=3, stride=2, pad=1):
    N, H, W, C = x.shape
    Ho = (H + 2 * pad - k) // stride + 1
    Wo = (W + 2 * pad - k) // stride + 1
    x_p = jnp.pad(x, ((0, 0), (pad, pad), (pad, pad), (0, 0)),
                  constant_values=-jnp.inf)
    taps = []
    for di in range(k):
        for dj in range(k):
            t = x_p[:, di:di + Ho * stride:stride, dj:dj + Wo * stride:stride, :]
            taps.append(t.reshape(N * Ho * Wo, C))
    M = N * Ho * Wo
    Mp, tm = _m_tiling(M)
    if Mp != M:
        taps = [jnp.pad(t, ((0, Mp - M), (0, 0))) for t in taps]
    spec = pl.BlockSpec((tm, C), lambda i: (i, 0))
    out = pl.pallas_call(
        _maxpool_kernel,
        out_shape=jax.ShapeDtypeStruct((Mp, C), x.dtype),
        grid_spec=pltpu.PrefetchScalarGridSpec(
            num_scalar_prefetch=0,
            grid=(Mp // tm,),
            in_specs=[spec] * (k * k),
            out_specs=spec),
        compiler_params=pltpu.CompilerParams(
            dimension_semantics=("parallel",)),
    )(*taps)
    return out[:M].reshape(N, Ho, Wo, C)


# ----------------------------------------------------------------------------
# Fused head: global average pool + fc (weights pre-padded to 128 lanes) + bias
# ----------------------------------------------------------------------------
def _head_kernel(x_ref, w_ref, b_ref, o_ref):
    pooled = jnp.mean(x_ref[...].astype(jnp.float32), axis=1)     # (N, C)
    o_ref[...] = (jnp.dot(pooled, w_ref[...],
                          preferred_element_type=jnp.float32) + b_ref[...])


def head(x, fc_wp, fc_bp, num_classes):
    N, H, W, C = x.shape
    x3 = x.reshape(N, H * W, C)
    out = pl.pallas_call(
        _head_kernel,
        out_shape=jax.ShapeDtypeStruct((N, fc_wp.shape[1]), jnp.float32),
    )(x3, fc_wp, fc_bp)
    return out[:, :num_classes]


# ----------------------------------------------------------------------------
# Conv wrappers (data movement only; all math is in the fused Pallas kernels)
# ----------------------------------------------------------------------------
def _im2col_matrix(x, kh, kw, stride, pad):
    # TODO(synk): im2col still materializes kh*kw shifted bf16 copies in HBM; a
    # direct-conv kernel with halo'd NHWC blocks (Element-offset BlockSpecs /
    # manual DMA) would remove this but is left out for lowering robustness.
    N, H, W, C = x.shape
    Ho = (H + 2 * pad - kh) // stride + 1
    Wo = (W + 2 * pad - kw) // stride + 1
    x_p = jnp.pad(x, ((0, 0), (pad, pad), (pad, pad), (0, 0)))
    cols = []
    for i in range(kh):
        for j in range(kw):
            cols.append(x_p[:, i:i + Ho * stride:stride,
                            j:j + Wo * stride:stride, :])
    patches = jnp.concatenate(cols, axis=-1)          # (N, Ho, Wo, kh*kw*C)
    return patches.reshape(N * Ho * Wo, kh * kw * C), Ho, Wo


def conv_bn(x, cp, relu=True, residual2d=None):
    """x NHWC bf16; cp holds pre-reshaped bf16 weight (K,Cout) + folded BN."""
    N, H, W, Cin = x.shape
    kh, kw, stride, pad = cp["kh"], cp["kw"], cp["stride"], cp["pad"]
    if kh == 1 and kw == 1:                           # 1x1 (downsample): no im2col
        Ho = (H - 1) // stride + 1
        Wo = (W - 1) // stride + 1
        a = x[:, ::stride, ::stride, :].reshape(N * Ho * Wo, Cin)
    else:
        a, Ho, Wo = _im2col_matrix(x, kh, kw, stride, pad)
    out2d = matmul_bn(a, cp["w"], cp["scale"], cp["bias"],
                      residual=residual2d, relu=relu)
    Cout = cp["w"].shape[1]
    return out2d.reshape(N, Ho, Wo, Cout)


def basic_block(x, blk):
    out = conv_bn(x, blk["conv1"], relu=True)
    if blk["down"] is not None:
        idn = conv_bn(x, blk["down"], relu=False)
        idn2d = idn.reshape(-1, idn.shape[-1])
    else:
        idn2d = x.reshape(-1, x.shape[-1])
    out = conv_bn(out, blk["conv2"], relu=True, residual2d=idn2d)
    return out


def skin_lesion_classifier_forward(prep, x_nchw):
    """Equivalent of SkinLesionClassifier.forward (ResNet-18, fc->num_classes)."""
    x = jnp.transpose(x_nchw, (0, 2, 3, 1)).astype(jnp.bfloat16)   # NCHW -> NHWC
    x = conv_bn(x, prep["stem"], relu=True)           # 7x7/2 conv + BN + ReLU
    x = maxpool2d(x, k=3, stride=2, pad=1)
    for blk in prep["blocks"]:
        x = basic_block(x, blk)
    return head(x, prep["fc_w"], prep["fc_b"], prep["num_classes"])


# ----------------------------------------------------------------------------
# Deterministic parameter construction + one-time prep (fold BN, reshape, bf16)
# ----------------------------------------------------------------------------
def make_params(key, num_classes=7):
    keys = iter(jax.random.split(key, 256))

    def conv_w(cout, cin, k):
        fan_in = cin * k * k
        return (jax.random.normal(next(keys), (cout, cin, k, k), jnp.float32)
                * (2.0 / fan_in) ** 0.5)

    def bn_p(c):
        return {
            "gamma": jax.random.uniform(next(keys), (c,), jnp.float32, 0.5, 1.5),
            "beta": 0.1 * jax.random.normal(next(keys), (c,), jnp.float32),
            "mean": 0.1 * jax.random.normal(next(keys), (c,), jnp.float32),
            "var": jax.random.uniform(next(keys), (c,), jnp.float32, 0.5, 1.5),
        }

    params = {"conv1": conv_w(64, 3, 7), "bn1": bn_p(64)}
    layers = []
    cin = 64
    for cout, stride in [(64, 1), (128, 2), (256, 2), (512, 2)]:
        blocks = []
        for b in range(2):
            s = stride if b == 0 else 1
            blk = {"stride": s,
                   "conv1": conv_w(cout, cin, 3), "bn1": bn_p(cout),
                   "conv2": conv_w(cout, cout, 3), "bn2": bn_p(cout),
                   "down": None}
            if s != 1 or cin != cout:
                blk["down"] = {"conv": conv_w(cout, cin, 1), "bn": bn_p(cout)}
            blocks.append(blk)
            cin = cout
        layers.append(blocks)
    params["layers"] = layers
    params["fc_w"] = (jax.random.normal(next(keys), (512, num_classes),
                                        jnp.float32) * (1.0 / 512) ** 0.5)
    params["fc_b"] = 0.01 * jax.random.normal(next(keys), (num_classes,),
                                              jnp.float32)
    return params


def _fold_bn(gamma, beta, mean, var):
    scale = gamma / jnp.sqrt(var + BN_EPS)
    bias = beta - mean * scale
    return (scale.reshape(1, -1).astype(jnp.float32),
            bias.reshape(1, -1).astype(jnp.float32))


def _prep_conv(w, bn, stride, pad):
    cout, cin, kh, kw = w.shape
    wm = jnp.transpose(w, (2, 3, 1, 0)).reshape(kh * kw * cin, cout)
    scale, bias = _fold_bn(**bn)
    return {"w": wm.astype(jnp.bfloat16), "scale": scale, "bias": bias,
            "kh": kh, "kw": kw, "stride": stride, "pad": pad}


def prepare_params(p):
    """One-time relayout: (K,Cout) bf16 weight mats, folded BN, padded fc."""
    prep = {"stem": _prep_conv(p["conv1"], p["bn1"], stride=2, pad=3)}
    blocks = []
    for layer in p["layers"]:
        for blk in layer:
            b = {"conv1": _prep_conv(blk["conv1"], blk["bn1"], blk["stride"], 1),
                 "conv2": _prep_conv(blk["conv2"], blk["bn2"], 1, 1),
                 "down": None}
            if blk["down"] is not None:
                b["down"] = _prep_conv(blk["down"]["conv"], blk["down"]["bn"],
                                       blk["stride"], 0)
            blocks.append(b)
    prep["blocks"] = blocks
    ncls = p["fc_w"].shape[1]
    npad = _round_up(ncls, 128)
    prep["fc_w"] = jnp.zeros((p["fc_w"].shape[0], npad),
                             jnp.float32).at[:, :ncls].set(p["fc_w"])
    prep["fc_b"] = jnp.zeros((1, npad), jnp.float32).at[0, :ncls].set(p["fc_b"])
    prep["num_classes"] = ncls
    return prep


# TODO(synk): torchvision `pretrained=True` checkpoint loading is intentionally
# replaced with deterministic random init (no file I/O allowed here).

if __name__ == "__main__":
    key = jax.random.PRNGKey(0)
    pkey, xkey = jax.random.split(key)
    params = make_params(pkey, num_classes=7)
    prep = prepare_params(params)

    # Small RGB batch: (batch=2, channels=3, spatial=32x32), NCHW like PyTorch.
    x = jax.random.normal(xkey, (2, 3, 32, 32), jnp.float32)

    logits = skin_lesion_classifier_forward(prep, x)
    logits = jax.block_until_ready(logits)

    assert logits.shape == (2, 7), logits.shape
    assert bool(jnp.all(jnp.isfinite(logits)))
    print("KERNEL_OK")
</pallas_src>

<mosaic_0001>
module attributes {stable_mosaic.version = 11 : i64} {
  func.func @_mm_bn_kernel(%arg0: i32, %arg1: memref<256x147xbf16, #tpu.memory_space<vmem>>, %arg2: memref<147x64xbf16, #tpu.memory_space<vmem>>, %arg3: memref<1x64xf32, #tpu.memory_space<vmem>>, %arg4: memref<1x64xf32, #tpu.memory_space<vmem>>, %arg5: memref<256x64xbf16, #tpu.memory_space<vmem>>) attributes {dimension_semantics = [#tpu.dimension_semantics<parallel>], iteration_bounds = array<i64: 2>, scalar_prefetch = 0 : i64, scratch_operands = 0 : i64, tpu.core_type = #tpu.core_type<tc>, window_params = [{transform_indices = @transform_0, window_bounds = array<i64: 256, 147>}, {pipeline_mode = #tpu.pipeline_mode<synchronous>, transform_indices = @transform_1, window_bounds = array<i64: 147, 64>}, {pipeline_mode = #tpu.pipeline_mode<synchronous>, transform_indices = @transform_2, window_bounds = array<i64: 1, 64>}, {pipeline_mode = #tpu.pipeline_mode<synchronous>, transform_indices = @transform_3, window_bounds = array<i64: 1, 64>}, {transform_indices = @transform_4, window_bounds = array<i64: 256, 64>}]} {
    %c0 = arith.constant 0 : index
    %c0_0 = arith.constant 0 : index
    %0 = vector.load %arg1[%c0, %c0_0] : memref<256x147xbf16, #tpu.memory_space<vmem>>, vector<256x147xbf16>
    %c0_1 = arith.constant 0 : index
    %c0_2 = arith.constant 0 : index
    %1 = vector.load %arg2[%c0_1, %c0_2] : memref<147x64xbf16, #tpu.memory_space<vmem>>, vector<147x64xbf16>
    %cst = arith.constant dense<0.000000e+00> : vector<256x64xf32>
    %2 = tpu.matmul %0, %1, %cst {dimension_numbers = #tpu.dot_dimension_numbers<[1], [0], [0], [1], [0, 0, 1, 1], [], []>} : vector<256x147xbf16>, vector<147x64xbf16>, vector<256x64xf32> -> vector<256x64xf32>
    %c0_3 = arith.constant 0 : index
    %c0_4 = arith.constant 0 : index
    %3 = vector.load %arg3[%c0_3, %c0_4] : memref<1x64xf32, #tpu.memory_space<vmem>>, vector<1x64xf32>
    %4 = vector.broadcast %3 : vector<1x64xf32> to vector<256x64xf32>
    %5 = arith.mulf %2, %4 : vector<256x64xf32>
    %c0_5 = arith.constant 0 : index
    %c0_6 = arith.constant 0 : index
    %6 = vector.load %arg4[%c0_5, %c0_6] : memref<1x64xf32, #tpu.memory_space<vmem>>, vector<1x64xf32>
    %7 = vector.broadcast %6 : vector<1x64xf32> to vector<256x64xf32>
    %8 = arith.addf %5, %7 : vector<256x64xf32>
    %cst_7 = arith.constant 0.000000e+00 : f32
    %9 = vector.broadcast %cst_7 : f32 to vector<256x64xf32>
    %10 = arith.maximumf %8, %9 : vector<256x64xf32>
    %11 = arith.truncf %10 : vector<256x64xf32> to vector<256x64xbf16>
    %c0_8 = arith.constant 0 : index
    %c0_9 = arith.constant 0 : index
    %12 = vector.load %arg5[%c0_8, %c0_9] : memref<256x64xbf16, #tpu.memory_space<vmem>>, vector<256x64xbf16>
    tpu.vector_store %arg5[%c0_8, %c0_9], %11 {strides = array<i32>} : memref<256x64xbf16, #tpu.memory_space<vmem>>, vector<256x64xbf16>,
    return
  }
  func.func @transform_0(%arg0: i32) -> (i32, i32) {
    %c0_i32 = arith.constant 0 : i32
    %c0_i32_0 = arith.constant 0 : i32
    return %arg0, %c0_i32 : i32, i32
  }
  func.func @transform_1(%arg0: i32) -> (i32, i32) {
    %c0_i32 = arith.constant 0 : i32
    %c0_i32_0 = arith.constant 0 : i32
    %c0_i32_1 = arith.constant 0 : i32
    return %c0_i32, %c0_i32_0 : i32, i32
  }
  func.func @transform_2(%arg0: i32) -> (i32, i32) {
    %c0_i32 = arith.constant 0 : i32
    %c0_i32_0 = arith.constant 0 : i32
    %c0_i32_1 = arith.constant 0 : i32
    return %c0_i32, %c0_i32_0 : i32, i32
  }
  func.func @transform_3(%arg0: i32) -> (i32, i32) {
    %c0_i32 = arith.constant 0 : i32
    %c0_i32_0 = arith.constant 0 : i32
    %c0_i32_1 = arith.constant 0 : i32
    return %c0_i32, %c0_i32_0 : i32, i32
  }
  func.func @transform_4(%arg0: i32) -> (i32, i32) {
    %c0_i32 = arith.constant 0 : i32
    %c0_i32_0 = arith.constant 0 : i32
    return %arg0, %c0_i32 : i32, i32
  }
}

</mosaic_0001>

<llo_original>
// kernel: tpu_custom_call.1
$region0: #{tpu_custom_call.1}
  #allocation0 [shape = 'u32[]', space=smem, size = 0x4, offset = 0x4, fixed_abs, tag = 'smem constant byte address 0x4 - core index']
  #allocation1 [shape = 'u32[144,128]{1,0:T(1,128)}', space=vmem, size = 0x12000, scoped, tag = 'internal scratch']
  %s0 = inlined_call_operand.vmem [shape: bf16[512,147], index: 0, kind: input, shape index: {}]
  %s1 = inlined_call_operand.vmem [shape: bf16[147,64], index: 1, kind: input, shape index: {}]
  %s2 = inlined_call_operand.vmem [shape: f32[1,64], index: 2, kind: input, shape index: {}]
  %s3 = inlined_call_operand.vmem [shape: f32[1,64], index: 3, kind: input, shape index: {}]
  %s4 = inlined_call_operand.vmem [shape: bf16[512,64], index: 4, kind: output, shape index: {}]
  %s5 = sld [smem:[#allocation0]]
  $region49: #{tpu_custom_call.1} parent=0
    _
  %s7 = ssub.s32 1, %s5
  %s8 = scalar_select 0, %s7, %s5
  loop: start=0, step=1, limit=4
  $region2: #{tpu_custom_call.1} parent=0 // loop_pre_header
    _
  $region3: #{tpu_custom_call.1} parent=0 // loop_header
    %s10 = sphi 0, %s14
    %p11 = scmp.ge.s32.totalorder %s10, 4
    %s20 = sphi 0, %s22
    %s23 = sphi 0, %s20
    %s24 = sphi 0, %s23
    %s40 = sphi 0, %s24
    %s44 = sphi 0, %s44
    %s46 = sphi 0, %s44
    %s47 = sphi 0, %s46
    %s61 = sphi 0, %s47
    %s65 = sphi 0, %s65
    %s67 = sphi 0, %s65
    %s68 = sphi 0, %s67
    %s82 = sphi 0, %s68
    %s86 = sphi 0, %s86
    %s88 = sphi 0, %s86
    %s89 = sphi 0, %s88
    %s103 = sphi 0, %s89
    %s109 = sphi 0, %s111
    %s112 = sphi 0, %s109
    %s113 = sphi 0, %s112
    %s129 = sphi 0, %s113
  $region4: #{tpu_custom_call.1} parent=0 // loop_header_branch
    %13 = sbr.rel (%p11) target = $region8
  $region5: #{tpu_custom_call.1} parent=0 // loop_body
    %s15 = ssub.s32 %s10, 1
    %s16 = ssub.s32 %s10, 2
    %s17 = sadd.s32 %s10, 1
    %s18 = ssub.s32 %s10, %s17
    %p19 = scmp.eq.s32.totalorder %s18, 0
    %s21 = sadd.s32 %s20, 1
    %s22 = scalar_select %p19, %s20, %s21
    %p25 = pneg %p19
    %p26 = scmp.eq.s32.totalorder %s10, 1
    %p27 = por %p25, %p26
    %p28 = scmp.ne.s32.totalorder %s20, %s23
    %p29 = scmp.eq.s32.totalorder %s10, 0
    %p30 = por %p28, %p29
    %p31 = scmp.ne.s32.totalorder %s20, %s23
    %p32 = scmp.eq.s32.totalorder %s15, 1
    %p33 = por %p31, %p32
    %p34 = scmp.ne.s32.totalorder %s23, %s24
    %p35 = scmp.eq.s32.totalorder %s15, 0
    %p36 = por %p34, %p35
    %p37 = scmp.ne.s32.totalorder %s23, %s24
    %p38 = scmp.eq.s32.totalorder %s16, 1
    %p39 = por %p37, %p38
    %p41 = scmp.ne.s32.totalorder %s24, %s40
    %p42 = scmp.eq.s32.totalorder %s16, 0
    %p43 = por %p41, %p42
    %s45 = sadd.s32 %s44, 1
    %p48 = scmp.eq.s32.totalorder %s10, 1
    %p49 = scmp.ne.s32.totalorder %s44, %s46
    %p50 = scmp.eq.s32.totalorder %s10, 0
    %p51 = por %p49, %p50
    %p52 = scmp.ne.s32.totalorder %s44, %s46
    %p53 = scmp.eq.s32.totalorder %s15, 1
    %p54 = por %p52, %p53
    %p55 = scmp.ne.s32.totalorder %s46, %s47
    %p56 = scmp.eq.s32.totalorder %s15, 0
    %p57 = por %p55, %p56
    %p58 = scmp.ne.s32.totalorder %s46, %s47
    %p59 = scmp.eq.s32.totalorder %s16, 1
    %p60 = por %p58, %p59
    %p62 = scmp.ne.s32.totalorder %s47, %s61
    %p63 = scmp.eq.s32.totalorder %s16, 0
    %p64 = por %p62, %p63
    %s66 = sadd.s32 %s65, 1
    %p69 = scmp.eq.s32.totalorder %s10, 1
    %p70 = scmp.ne.s32.totalorder %s65, %s67
    %p71 = scmp.eq.s32.totalorder %s10, 0
    %p72 = por %p70, %p71
    %p73 = scmp.ne.s32.totalorder %s65, %s67
    %p74 = scmp.eq.s32.totalorder %s15, 1
    %p75 = por %p73, %p74
    %p76 = scmp.ne.s32.totalorder %s67, %s68
    %p77 = scmp.eq.s32.totalorder %s15, 0
    %p78 = por %p76, %p77
    %p79 = scmp.ne.s32.totalorder %s67, %s68
    %p80 = scmp.eq.s32.totalorder %s16, 1
    %p81 = por %p79, %p80
    %p83 = scmp.ne.s32.totalorder %s68, %s82
    %p84 = scmp.eq.s32.totalorder %s16, 0
    %p85 = por %p83, %p84
    %s87 = sadd.s32 %s86, 1
    %p90 = scmp.eq.s32.totalorder %s10, 1
    %p91 = scmp.ne.s32.totalorder %s86, %s88
    %p92 = scmp.eq.s32.totalorder %s10, 0
    %p93 = por %p91, %p92
    %p94 = scmp.ne.s32.totalorder %s86, %s88
    %p95 = scmp.eq.s32.totalorder %s15, 1
    %p96 = por %p94, %p95
    %p97 = scmp.ne.s32.totalorder %s88, %s89
    %p98 = scmp.eq.s32.totalorder %s15, 0
    %p99 = por %p97, %p98
    %p100 = scmp.ne.s32.totalorder %s88, %s89
    %p101 = scmp.eq.s32.totalorder %s16, 1
    %p102 = por %p100, %p101
    %p104 = scmp.ne.s32.totalorder %s89, %s103
    %p105 = scmp.eq.s32.totalorder %s16, 0
    %p106 = por %p104, %p105
    %s107 = ssub.s32 %s10, %s17
    %p108 = scmp.eq.s32.totalorder %s107, 0
    %s110 = sadd.s32 %s109, 1
    %s111 = scalar_select %p108, %s109, %s110
    %p114 = pneg %p108
    %p115 = scmp.eq.s32.totalorder %s10, 1
    %p116 = por %p114, %p115
    %p117 = scmp.ne.s32.totalorder %s109, %s112
    %p118 = scmp.eq.s32.totalorder %s10, 0
    %p119 = por %p117, %p118
    %p120 = scmp.ne.s32.totalorder %s109, %s112
    %p121 = scmp.eq.s32.totalorder %s15, 1
    %p122 = por %p120, %p121
    %p123 = scmp.ne.s32.totalorder %s112, %s113
    %p124 = scmp.eq.s32.totalorder %s15, 0
    %p125 = por %p123, %p124
    %p126 = scmp.ne.s32.totalorder %s112, %s113
    %p127 = scmp.eq.s32.totalorder %s16, 1
    %p128 = por %p126, %p127
    %p130 = scmp.ne.s32.totalorder %s113, %s129
    %p131 = scmp.eq.s32.totalorder %s16, 0
    %p132 = por %p130, %p131
    %p133 = scmp.le.s32.totalorder 1, %s10
    %p134 = scmp.lt.s32.totalorder %s10, 3
    %p135 = pnand %p133, %p134
    %p136 = pneg %p135
    // Predicated region
    $region9: #{tpu_custom_call.1} parent=5 // pred_check
      _
    $region10: #{tpu_custom_call.1} parent=5 // pred_check_branch
      %138 = sbr.rel (%p135) target = $region12
    $region11: #{tpu_custom_call.1} parent=5 // pred_region
      %s139 = ssub.s32 %s10, 1
      // Predicated region
      $region13: #{tpu_custom_call.1} parent=11 // pred_check
        %p140 = pneg %p57
      $region14: #{tpu_custom_call.1} parent=11 // pred_check_branch
        %142 = sbr.rel (%p140) target = $region16
      $region15: #{tpu_custom_call.1} parent=11 // pred_region
        _
      $region16: #{tpu_custom_call.1} parent=11 // pred_fallthru
        _
      // Predicated region
      $region17: #{tpu_custom_call.1} parent=11 // pred_check
        %p143 = pneg %p78
      $region18: #{tpu_custom_call.1} parent=11 // pred_check_branch
        %145 = sbr.rel (%p143) target = $region20
      $region19: #{tpu_custom_call.1} parent=11 // pred_region
        _
      $region20: #{tpu_custom_call.1} parent=11 // pred_fallthru
        _
      // Predicated region
      $region21: #{tpu_custom_call.1} parent=11 // pred_check
        %p146 = pneg %p99
      $region22: #{tpu_custom_call.1} parent=11 // pred_check_branch
        %148 = sbr.rel (%p146) target = $region24
      $region23: #{tpu_custom_call.1} parent=11 // pred_region
        _
      $region24: #{tpu_custom_call.1} parent=11 // pred_fallthru
        _
    $region12: #{tpu_custom_call.1} parent=5 // pred_fallthru
      _
    %p149 = scmp.lt.s32.totalorder %s10, 2
    // Predicated region
    $region25: #{tpu_custom_call.1} parent=5 // pred_check
      %p150 = pneg %p149
    $region26: #{tpu_custom_call.1} parent=5 // pred_check_branch
      %152 = sbr.rel (%p150) target = $region28
    $region27: #{tpu_custom_call.1} parent=5 // pred_region
      // Predicated region
      $region29: #{tpu_custom_call.1} parent=27 // pred_check
        %p153 = pneg %p30
      $region30: #{tpu_custom_call.1} parent=27 // pred_check_branch
        %155 = sbr.rel (%p153) target = $region32
      $region31: #{tpu_custom_call.1} parent=27 // pred_region
        %s156 = smul.u32 32, %s10
        %p157 = scmp.lt.s32.totalorder %s156, 63
        %s158 = scalar_select %p157, %s156, 63
        %s159 = smul.addr %s158, 2
        %s160 = smul.addr %s159, 4
        %s161 = scalar_lea.vmem %s0, %s160
        %s162 = smul.u32 32, %s10
      $region32: #{tpu_custom_call.1} parent=27 // pred_fallthru
        _
    $region28: #{tpu_custom_call.1} parent=5 // pred_fallthru
      _
    %p163 = scmp.le.s32.totalorder 1, %s10
    %p164 = scmp.lt.s32.totalorder %s10, 3
    %p165 = pnand %p163, %p164
    %p166 = pneg %p165
    // Predicated region
    $region33: #{tpu_custom_call.1} parent=5 // pred_check
      _
    $region34: #{tpu_custom_call.1} parent=5 // pred_check_branch
      %168 = sbr.rel (%p165) target = $region36
    $region35: #{tpu_custom_call.1} parent=5 // pred_region
      %s169 = ssub.s32 %s10, 1
      %s170 = smul.u32 32, %s15
      %p171 = scmp.lt.s32.totalorder %s170, 63
      %s172 = scalar_select %p171, %s170, 63
      %s173 = smul.addr %s172, 2
      %s174 = smul.addr %s173, 4
      %s175 = scalar_lea.vmem %s0, %s174
      %p176 = pneg %p36
      %p177 = pneg %p33
      %p178 = pneg %p57
      %p179 = pneg %p54
      %p180 = pneg %p78
      %p181 = pneg %p75
      %p182 = pneg %p99
      %p183 = pneg %p96
      %p184 = pneg %p125
      %p185 = pneg %p122
      %s186 = smul.u32 32, %s15
      %p187 = scmp.lt.s32.totalorder %s186, 63
      %s188 = scalar_select %p187, %s186, 63
      %s189 = smul.addr %s188, 4
      %s190 = scalar_lea.vmem %s4, %s189
      %s191 = smul.u32 32, %s15
      %p192 = scmp.lt.s32.totalorder %s191, 63
      %s193 = scalar_select %p192, %s191, 63
      %s194 = smul.addr %s193, 2
      %s195 = smul.addr %s194, 4
      %s196 = scalar_lea.vmem %s0, %s195
      %s197 = smul.u32 32, %s15
      %s198 = smul.u32 32, %s15
      %p199 = scmp.lt.s32.totalorder %s198, 63
      %s200 = scalar_select %p199, %s198, 63
      %s201 = smul.addr %s200, 4
      %s202 = scalar_lea.vmem %s4, %s201
      %s203 = smul.u32 32, %s15
      %v205 = vld [vmem:[%s196] sm:$0xff]
      %v206 = vld [vmem:[%s196 + $0x8] sm:$0xff]
      %v207 = vld [vmem:[%s196 + $0x10] sm:$0xff]
      %v208 = vld [vmem:[%s196 + $0x18] sm:$0xff]
      %v209 = vld [vmem:[%s196 + $0x20] sm:$0xff]
      %v210 = vld [vmem:[%s196 + $0x28] sm:$0xff]
      %v211 = vld [vmem:[%s196 + $0x30] sm:$0xff]
      %v212 = vld [vmem:[%s196 + $0x38] sm:$0xff]
      %v213 = vld [vmem:[%s196 + $0x40] sm:$0xff]
      %v214 = vld [vmem:[%s196 + $0x48] sm:$0xff]
      %v215 = vld [vmem:[%s196 + $0x50] sm:$0xff]
      %v216 = vld [vmem:[%s196 + $0x58] sm:$0xff]
      %v217 = vld [vmem:[%s196 + $0x60] sm:$0xff]
      %v218 = vld [vmem:[%s196 + $0x68] sm:$0xff]
      %v219 = vld [vmem:[%s196 + $0x70] sm:$0xff]
      %v220 = vld [vmem:[%s196 + $0x78] sm:$0xff]
      %v221 = vld [vmem:[%s196 + $0x80] sm:$0xff]
      %v222 = vld [vmem:[%s196 + $0x88] sm:$0xff]
      %v223 = vld [vmem:[%s196 + $0x90] sm:$0xff]
      %v224 = vld [vmem:[%s196 + $0x98] sm:$0xff]
      %v225 = vld [vmem:[%s196 + $0xa0] sm:$0xff]
      %v226 = vld [vmem:[%s196 + $0xa8] sm:$0xff]
      %v227 = vld [vmem:[%s196 + $0xb0] sm:$0xff]
      %v228 = vld [vmem:[%s196 + $0xb8] sm:$0xff]
      %v229 = vld [vmem:[%s196 + $0xc0] sm:$0xff]
      %v230 = vld [vmem:[%s196 + $0xc8] sm:$0xff]
      %v231 = vld [vmem:[%s196 + $0xd0] sm:$0xff]
      %v232 = vld [vmem:[%s196 + $0xd8] sm:$0xff]
      %v233 = vld [vmem:[%s196 + $0xe0] sm:$0xff]
      %v234 = vld [vmem:[%s196 + $0xe8] sm:$0xff]
      %v235 = vld [vmem:[%s196 + $0xf0] sm:$0xff]
      %v236 = vld [vmem:[%s196 + $0xf8] sm:$0xff]
      %v237 = vld [vmem:[%s1] sm:$0xf]
      %v238 = vld [vmem:[%s1 + $0x4] sm:$0xf]
      %v239 = vld [vmem:[%s1 + $0x8] sm:$0xf]
      %v240 = vld [vmem:[%s1 + $0xc] sm:$0xf]
      %v241 = vld [vmem:[%s1 + $0x10] sm:$0xf]
      %v242 = vld [vmem:[%s1 + $0x14] sm:$0xf]
      %v243 = vld [vmem:[%s1 + $0x18] sm:$0xf]
      %v244 = vld [vmem:[%s1 + $0x1c] sm:$0xf]
      %v245 = vld [vmem:[%s1 + $0x20] sm:$0xf]
      %v246 = vld [vmem:[%s1 + $0x24] sm:$0xf]
      %v247 = vld [vmem:[%s1 + $0x28] sm:$0xf]
      %v248 = vld [vmem:[%s1 + $0x2c] sm:$0xf]
      %v249 = vld [vmem:[%s1 + $0x30] sm:$0xf]
      %v250 = vld [vmem:[%s1 + $0x34] sm:$0xf]
      %v251 = vld [vmem:[%s1 + $0x38] sm:$0xf]
      %v252 = vld [vmem:[%s1 + $0x3c] sm:$0xf]
      %v253 = vld [vmem:[%s1 + $0x40] sm:$0xf]
      %v254 = vld [vmem:[%s1 + $0x44] sm:$0xf]
      %v255 = vld [vmem:[%s1 + $0x48] sm:$0x3]
      %v288 = vunpack.c.l.b16 %v205
      %v289 = vunpack.c.h.b16 %v205
      %v290 = vunpack.c.l.b16 %v206
      %v291 = vunpack.c.h.b16 %v206
      %v292 = vunpack.c.l.b16 %v207
      %v293 = vunpack.c.h.b16 %v207
      %v294 = vunpack.c.l.b16 %v208
      %v295 = vunpack.c.h.b16 %v208
      %v296 = vunpack.c.l.b16 %v209
      %v297 = vunpack.c.h.b16 %v209
      %v298 = vunpack.c.l.b16 %v210
      %v299 = vunpack.c.h.b16 %v210
      %v300 = vunpack.c.l.b16 %v211
      %v301 = vunpack.c.h.b16 %v211
      %v302 = vunpack.c.l.b16 %v212
      %v303 = vunpack.c.h.b16 %v212
      %v304 = vunpack.c.l.b16 %v213
      %v305 = vunpack.c.h.b16 %v213
      %v306 = vunpack.c.l.b16 %v214
      %v307 = vunpack.c.h.b16 %v214
      %v308 = vunpack.c.l.b16 %v215
      %v309 = vunpack.c.h.b16 %v215
      %v310 = vunpack.c.l.b16 %v216
      %v311 = vunpack.c.h.b16 %v216
      %v312 = vunpack.c.l.b16 %v217
      %v313 = vunpack.c.h.b16 %v217
      %v314 = vunpack.c.l.b16 %v218
      %v315 = vunpack.c.h.b16 %v218
      %v316 = vunpack.c.l.b16 %v219
      %v317 = vunpack.c.h.b16 %v219
      %v318 = vunpack.c.l.b16 %v220
      %v319 = vunpack.c.h.b16 %v220
      %v320 = vunpack.c.l.b16 %v221
      %v321 = vunpack.c.h.b16 %v221
      %v322 = vunpack.c.l.b16 %v222
      %v323 = vunpack.c.h.b16 %v222
      %v324 = vunpack.c.l.b16 %v223
      %v325 = vunpack.c.h.b16 %v223
      %v326 = vunpack.c.l.b16 %v224
      %v327 = vunpack.c.h.b16 %v224
      %v328 = vunpack.c.l.b16 %v225
      %v329 = vunpack.c.h.b16 %v225
      %v330 = vunpack.c.l.b16 %v226
      %v331 = vunpack.c.h.b16 %v226
      %v332 = vunpack.c.l.b16 %v227
      %v333 = vunpack.c.h.b16 %v227
      %v334 = vunpack.c.l.b16 %v228
      %v335 = vunpack.c.h.b16 %v228
      %v336 = vunpack.c.l.b16 %v229
      %v337 = vunpack.c.h.b16 %v229
      %v338 = vunpack.c.l.b16 %v230
      %v339 = vunpack.c.h.b16 %v230
      %v340 = vunpack.c.l.b16 %v231
      %v341 = vunpack.c.h.b16 %v231
      %v342 = vunpack.c.l.b16 %v232
      %v343 = vunpack.c.h.b16 %v232
      %v344 = vunpack.c.l.b16 %v233
      %v345 = vunpack.c.h.b16 %v233
      %v346 = vunpack.c.l.b16 %v234
      %v347 = vunpack.c.h.b16 %v234
      %v348 = vunpack.c.l.b16 %v235
      %v349 = vunpack.c.h.b16 %v235
      %v350 = vunpack.c.l.b16 %v236
      %v351 = vunpack.c.h.b16 %v236
      %v352 = vpack.c.b16 %v290, %v288
      %v353 = vpack.c.b16 %v291, %v289
      %v354 = vpack.c.b16 %v294, %v292
      %v355 = vpack.c.b16 %v295, %v293
      %v356 = vpack.c.b16 %v298, %v296
      %v357 = vpack.c.b16 %v299, %v297
      %v358 = vpack.c.b16 %v302, %v300
      %v359 = vpack.c.b16 %v303, %v301
      %v360 = vpack.c.b16 %v306, %v304
      %v361 = vpack.c.b16 %v307, %v305
      %v362 = vpack.c.b16 %v310, %v308
      %v363 = vpack.c.b16 %v311, %v309
      %v364 = vpack.c.b16 %v314, %v312
      %v365 = vpack.c.b16 %v315, %v313
      %v366 = vpack.c.b16 %v318, %v316
      %v367 = vpack.c.b16 %v319, %v317
      %v368 = vpack.c.b16 %v322, %v320
      %v369 = vpack.c.b16 %v323, %v321
      %v370 = vpack.c.b16 %v326, %v324
      %v371 = vpack.c.b16 %v327, %v325
      %v372 = vpack.c.b16 %v330, %v328
      %v373 = vpack.c.b16 %v331, %v329
      %v374 = vpack.c.b16 %v334, %v332
      %v375 = vpack.c.b16 %v335, %v333
      %v376 = vpack.c.b16 %v338, %v336
      %v377 = vpack.c.b16 %v339, %v337
      %v378 = vpack.c.b16 %v342, %v340
      %v379 = vpack.c.b16 %v343, %v341
      %v380 = vpack.c.b16 %v346, %v344
      %v381 = vpack.c.b16 %v347, %v345
      %v382 = vpack.c.b16 %v350, %v348
      %v383 = vpack.c.b16 %v351, %v349
      %v419 = vunpack.c.l.b16 %v237
      %v420 = vunpack.c.l.b16 %v238
      %v421 = vunpack.c.l.b16 %v239
      %v422 = vunpack.c.l.b16 %v240
      %v423 = vunpack.c.l.b16 %v241
      %v424 = vunpack.c.l.b16 %v242
      %v425 = vunpack.c.l.b16 %v243
      %v426 = vunpack.c.l.b16 %v244
      %v427 = vunpack.c.l.b16 %v245
      %v428 = vunpack.c.l.b16 %v246
      %v429 = vunpack.c.l.b16 %v247
      %v430 = vunpack.c.l.b16 %v248
      %v431 = vunpack.c.l.b16 %v249
      %v432 = vunpack.c.l.b16 %v250
      %v433 = vunpack.c.l.b16 %v251
      %v434 = vunpack.c.l.b16 %v252
      %v435 = vunpack.c.l.b16 %v253
      %v436 = vunpack.c.l.b16 %v254
      %v437 = vunpack.c.l.b16 %v255
      %v438 = vpack.c.b16 %v420, %v419
      %v439 = vpack.c.b16 %v422, %v421
      %v440 = vpack.c.b16 %v424, %v423
      %v441 = vpack.c.b16 %v426, %v425
      %v442 = vpack.c.b16 %v428, %v427
      %v443 = vpack.c.b16 %v430, %v429
      %v444 = vpack.c.b16 %v432, %v431
      %v445 = vpack.c.b16 %v434, %v433
      %v446 = vpack.c.b16 %v436, %v435
      %v447 = vpack.c.b16 %v437, %v437
      %vm457 = vcmask 154624
      %v459 = vsel %vm457, %v353, 0
      %v462 = vsel %vm457, %v355, 0
      %v465 = vsel %vm457, %v357, 0
      %v468 = vsel %vm457, %v359, 0
      %v471 = vsel %vm457, %v361, 0
      %v474 = vsel %vm457, %v363, 0
      %v477 = vsel %vm457, %v365, 0
      %v480 = vsel %vm457, %v367, 0
      %v483 = vsel %vm457, %v369, 0
      %v486 = vsel %vm457, %v371, 0
      %v489 = vsel %vm457, %v373, 0
      %v492 = vsel %vm457, %v375, 0
      %v495 = vsel %vm457, %v377, 0
      %v498 = vsel %vm457, %v379, 0
      %v501 = vsel %vm457, %v381, 0
      %v504 = vsel %vm457, %v383, 0
      %vm506 = vcmask 1040384
      %vm507 = vcmask 1041408
      %v508 = vsel %vm506, 4294967295, 65535
      %v509 = vsel %vm507, %v508, 0
      %v511 = vand.u32 %v447, %v509
      %513 = vmatprep.subr.bf16.mxu0 0
      %514 = vmatpush1.bf16.msra.mxu0 %v445
      %515 = vmatprep.subr.bf16.mxu0 0
      %516 = vmatpush1.bf16.msra.mxu0 %v444
      %517 = vmatprep.subr.bf16.mxu0 0
      %518 = vmatpush1.bf16.msra.mxu0 %v443
      %519 = vmatprep.subr.bf16.mxu0 0
      %520 = vmatpush1.bf16.msra.mxu0 %v442
      %521 = vmatprep.subr.bf16.mxu0 0
      %522 = vmatpush1.bf16.msra.mxu0 %v441
      %523 = vmatprep.subr.bf16.mxu0 0
      %524 = vmatpush1.bf16.msra.mxu0 %v440
      %525 = vmatprep.subr.bf16.mxu0 0
      %526 = vmatpush1.bf16.msra.mxu0 %v439
      %527 = vmatprep.subr.bf16.mxu0 0
      %528 = vmatpush1.bf16.msra.mxu0 %v438
      %529 = vmatprep.subr.bf16.mxu0 0
      %530 = vmatpush2.bf16.msra.mxu0 0
      %531 = vmatprep.subr.bf16.mxu0 0
      %532 = vmatpush2.bf16.msra.mxu0 0
      %533 = vmatprep.subr.bf16.mxu0 0
      %534 = vmatpush2.bf16.msra.mxu0 0
      %535 = vmatprep.subr.bf16.mxu0 0
      %536 = vmatpush2.bf16.msra.mxu0 0
      %537 = vmatprep.subr.bf16.mxu0 0
      %538 = vmatpush2.bf16.msra.mxu0 0
      %539 = vmatprep.subr.bf16.mxu0 0
      %540 = vmatpush2.bf16.msra.mxu0 0
      %541 = vmatprep.subr.bf16.mxu0 0
      %542 = vmatpush2.bf16.msra.mxu0 %v511
      %543 = vmatprep.subr.bf16.mxu0 0
      %544 = vmatpush2.bf16.msra.mxu0 %v446
      %545 = vmatprep.mubr.bf16.mxu0 %v459
      %546 = vmatmul.mubr.bf16.gmra.mxu0 %v352
      %v547 = vpop.f32.mrf.mxu0
      %v548 = vadd.f32 0.0, %v547
      %v549 = vpop.f32.mrf.mxu0
      %v550 = vpop.f32.mrf.mxu0
      %v551 = vadd.f32 0.0, %v550
      %v552 = vpop.f32.mrf.mxu0
      %553 = vmatprep.mubr.bf16.mxu0 %v462
      %554 = vmatmul.mubr.bf16.gmra.mxu0 %v354
      %v555 = vpop.f32.mrf.mxu0
      %v556 = vadd.f32 0.0, %v555
      %v557 = vpop.f32.mrf.mxu0
      %v558 = vpop.f32.mrf.mxu0
      %v559 = vadd.f32 0.0, %v558
      %v560 = vpop.f32.mrf.mxu0
      %561 = vmatprep.mubr.bf16.mxu0 %v465
      %562 = vmatmul.mubr.bf16.gmra.mxu0 %v356
      %v563 = vpop.f32.mrf.mxu0
      %v564 = vadd.f32 0.0, %v563
      %v565 = vpop.f32.mrf.mxu0
      %v566 = vpop.f32.mrf.mxu0
      %v567 = vadd.f32 0.0, %v566
      %v568 = vpop.f32.mrf.mxu0
      %569 = vmatprep.mubr.bf16.mxu0 %v468
      %570 = vmatmul.mubr.bf16.gmra.mxu0 %v358
      %v571 = vpop.f32.mrf.mxu0
      %v572 = vadd.f32 0.0, %v571
      %v573 = vpop.f32.mrf.mxu0
      %v574 = vpop.f32.mrf.mxu0
      %v575 = vadd.f32 0.0, %v574
      %v576 = vpop.f32.mrf.mxu0
      %577 = vmatprep.mubr.bf16.mxu0 %v471
      %578 = vmatmul.mubr.bf16.gmra.mxu0 %v360
      %v579 = vpop.f32.mrf.mxu0
      %v580 = vadd.f32 0.0, %v579
      %v581 = vpop.f32.mrf.mxu0
      %v582 = vpop.f32.mrf.mxu0
      %v583 = vadd.f32 0.0, %v582
      %v584 = vpop.f32.mrf.mxu0
      %585 = vmatprep.mubr.bf16.mxu0 %v474
      %586 = vmatmul.mubr.bf16.gmra.mxu0 %v362
      %v587 = vpop.f32.mrf.mxu0
      %v588 = vadd.f32 0.0, %v587
      %v589 = vpop.f32.mrf.mxu0
      %v590 = vpop.f32.mrf.mxu0
      %v591 = vadd.f32 0.0, %v590
      %v592 = vpop.f32.mrf.mxu0
      %593 = vmatprep.mubr.bf16.mxu0 %v477
      %594 = vmatmul.mubr.bf16.gmra.mxu0 %v364
      %v595 = vpop.f32.mrf.mxu0
      %v596 = vadd.f32 0.0, %v595
      %v597 = vpop.f32.mrf.mxu0
      %v598 = vpop.f32.mrf.mxu0
      %v599 = vadd.f32 0.0, %v598
      %v600 = vpop.f32.mrf.mxu0
      %601 = vmatprep.mubr.bf16.mxu0 %v480
      %602 = vmatmul.mubr.bf16.gmra.mxu0 %v366
      %v603 = vpop.f32.mrf.mxu0
      %v604 = vadd.f32 0.0, %v603
      %v605 = vpop.f32.mrf.mxu0
      %v606 = vpop.f32.mrf.mxu0
      %v607 = vadd.f32 0.0, %v606
      %v608 = vpop.f32.mrf.mxu0
      %609 = vmatprep.mubr.bf16.mxu0 %v483
      %610 = vmatmul.mubr.bf16.gmra.mxu0 %v368
      %v611 = vpop.f32.mrf.mxu0
      %v612 = vadd.f32 0.0, %v611
      %v613 = vpop.f32.mrf.mxu0
      %v614 = vpop.f32.mrf.mxu0
      %v615 = vadd.f32 0.0, %v614
      %v616 = vpop.f32.mrf.mxu0
      %617 = vmatprep.mubr.bf16.mxu0 %v486
      %618 = vmatmul.mubr.bf16.gmra.mxu0 %v370
      %v619 = vpop.f32.mrf.mxu0
      %v620 = vadd.f32 0.0, %v619
      %v621 = vpop.f32.mrf.mxu0
      %v622 = vpop.f32.mrf.mxu0
      %v623 = vadd.f32 0.0, %v622
      %v624 = vpop.f32.mrf.mxu0
      %625 = vmatprep.mubr.bf16.mxu0 %v489
      %626 = vmatmul.mubr.bf16.gmra.mxu0 %v372
      %v627 = vpop.f32.mrf.mxu0
      %v628 = vadd.f32 0.0, %v627
      %v629 = vpop.f32.mrf.mxu0
      %v630 = vpop.f32.mrf.mxu0
      %v631 = vadd.f32 0.0, %v630
      %v632 = vpop.f32.mrf.mxu0
      %633 = vmatprep.mubr.bf16.mxu0 %v492
      %634 = vmatmul.mubr.bf16.gmra.mxu0 %v374
      %v635 = vpop.f32.mrf.mxu0
      %v636 = vadd.f32 0.0, %v635
      %v637 = vpop.f32.mrf.mxu0
      %v638 = vpop.f32.mrf.mxu0
      %v639 = vadd.f32 0.0, %v638
      %v640 = vpop.f32.mrf.mxu0
      %641 = vmatprep.mubr.bf16.mxu0 %v495
      %642 = vmatmul.mubr.bf16.gmra.mxu0 %v376
      %v643 = vpop.f32.mrf.mxu0
      %v644 = vadd.f32 0.0, %v643
      %v645 = vpop.f32.mrf.mxu0
      %v646 = vpop.f32.mrf.mxu0
      %v647 = vadd.f32 0.0, %v646
      %v648 = vpop.f32.mrf.mxu0
      %649 = vmatprep.mubr.bf16.mxu0 %v498
      %650 = vmatmul.mubr.bf16.gmra.mxu0 %v378
      %v651 = vpop.f32.mrf.mxu0
      %v652 = vadd.f32 0.0, %v651
      %v653 = vpop.f32.mrf.mxu0
      %v654 = vpop.f32.mrf.mxu0
      %v655 = vadd.f32 0.0, %v654
      %v656 = vpop.f32.mrf.mxu0
      %657 = vmatprep.mubr.bf16.mxu0 %v501
      %658 = vmatmul.mubr.bf16.gmra.mxu0 %v380
      %v659 = vpop.f32.mrf.mxu0
      %v660 = vadd.f32 0.0, %v659
      %v661 = vpop.f32.mrf.mxu0
      %v662 = vpop.f32.mrf.mxu0
      %v663 = vadd.f32 0.0, %v662
      %v664 = vpop.f32.mrf.mxu0
      %665 = vmatprep.mubr.bf16.mxu0 %v504
      %666 = vmatmul.mubr.bf16.gmra.mxu0 %v382
      %v667 = vpop.f32.mrf.mxu0
      %v668 = vadd.f32 0.0, %v667
      %v669 = vpop.f32.mrf.mxu0
      %v670 = vpop.f32.mrf.mxu0
      %v671 = vadd.f32 0.0, %v670
      %v672 = vpop.f32.mrf.mxu0
      %673 = vdwg.mxu0
      %v674 = vld [vmem:[%s2] sm:$0x1]
      %v676 = vlaneseq
      %v677 = vshrl.u32 %v676, 7
      %v678 = vsub.s32 0, %v677
      %v679 = vrot.slane %v674, %v678
      %v681 = vmul.f32 %v548, %v679
      %v682 = vmul.f32 %v551, %v679
      %v683 = vmul.f32 %v556, %v679
      %v684 = vmul.f32 %v559, %v679
      %v685 = vmul.f32 %v564, %v679
      %v686 = vmul.f32 %v567, %v679
      %v687 = vmul.f32 %v572, %v679
      %v688 = vmul.f32 %v575, %v679
      %v689 = vmul.f32 %v580, %v679
      %v690 = vmul.f32 %v583, %v679
      %v691 = vmul.f32 %v588, %v679
      %v692 = vmul.f32 %v591, %v679
      %v693 = vmul.f32 %v596, %v679
      %v694 = vmul.f32 %v599, %v679
      %v695 = vmul.f32 %v604, %v679
      %v696 = vmul.f32 %v607, %v679
      %v697 = vmul.f32 %v612, %v679
      %v698 = vmul.f32 %v615, %v679
      %v699 = vmul.f32 %v620, %v679
      %v700 = vmul.f32 %v623, %v679
      %v701 = vmul.f32 %v628, %v679
      %v702 = vmul.f32 %v631, %v679
      %v703 = vmul.f32 %v636, %v679
      %v704 = vmul.f32 %v639, %v679
      %v705 = vmul.f32 %v644, %v679
      %v706 = vmul.f32 %v647, %v679
      %v707 = vmul.f32 %v652, %v679
      %v708 = vmul.f32 %v655, %v679
      %v709 = vmul.f32 %v660, %v679
      %v710 = vmul.f32 %v663, %v679
      %v711 = vmul.f32 %v668, %v679
      %v712 = vmul.f32 %v671, %v679
      %v713 = vld [vmem:[%s3] sm:$0x1]
      %v715 = vlaneseq
      %v716 = vshrl.u32 %v715, 7
      %v717 = vsub.s32 0, %v716
      %v718 = vrot.slane %v713, %v717
      %v720 = vadd.f32 %v681, %v718
      %v721 = vadd.f32 %v682, %v718
      %v722 = vadd.f32 %v683, %v718
      %v723 = vadd.f32 %v684, %v718
      %v724 = vadd.f32 %v685, %v718
      %v725 = vadd.f32 %v686, %v718
      %v726 = vadd.f32 %v687, %v718
      %v727 = vadd.f32 %v688, %v718
      %v728 = vadd.f32 %v689, %v718
      %v729 = vadd.f32 %v690, %v718
      %v730 = vadd.f32 %v691, %v718
      %v731 = vadd.f32 %v692, %v718
      %v732 = vadd.f32 %v693, %v718
      %v733 = vadd.f32 %v694, %v718
      %v734 = vadd.f32 %v695, %v718
      %v735 = vadd.f32 %v696, %v718
      %v736 = vadd.f32 %v697, %v718
      %v737 = vadd.f32 %v698, %v718
      %v738 = vadd.f32 %v699, %v718
      %v739 = vadd.f32 %v700, %v718
      %v740 = vadd.f32 %v701, %v718
      %v741 = vadd.f32 %v702, %v718
      %v742 = vadd.f32 %v703, %v718
      %v743 = vadd.f32 %v704, %v718
      %v744 = vadd.f32 %v705, %v718
      %v745 = vadd.f32 %v706, %v718
      %v746 = vadd.f32 %v707, %v718
      %v747 = vadd.f32 %v708, %v718
      %v748 = vadd.f32 %v709, %v718
      %v749 = vadd.f32 %v710, %v718
      %v750 = vadd.f32 %v711, %v718
      %v751 = vadd.f32 %v712, %v718
      %v752 = vmax.f32 %v720, 0.0
      %v753 = vmax.f32 %v721, 0.0
      %v754 = vmax.f32 %v722, 0.0
      %v755 = vmax.f32 %v723, 0.0
      %v756 = vmax.f32 %v724, 0.0
      %v757 = vmax.f32 %v725, 0.0
      %v758 = vmax.f32 %v726, 0.0
      %v759 = vmax.f32 %v727, 0.0
      %v760 = vmax.f32 %v728, 0.0
      %v761 = vmax.f32 %v729, 0.0
      %v762 = vmax.f32 %v730, 0.0
      %v763 = vmax.f32 %v731, 0.0
      %v764 = vmax.f32 %v732, 0.0
      %v765 = vmax.f32 %v733, 0.0
      %v766 = vmax.f32 %v734, 0.0
      %v767 = vmax.f32 %v735, 0.0
      %v768 = vmax.f32 %v736, 0.0
      %v769 = vmax.f32 %v737, 0.0
      %v770 = vmax.f32 %v738, 0.0
      %v771 = vmax.f32 %v739, 0.0
      %v772 = vmax.f32 %v740, 0.0
      %v773 = vmax.f32 %v741, 0.0
      %v774 = vmax.f32 %v742, 0.0
      %v775 = vmax.f32 %v743, 0.0
      %v776 = vmax.f32 %v744, 0.0
      %v777 = vmax.f32 %v745, 0.0
      %v778 = vmax.f32 %v746, 0.0
      %v779 = vmax.f32 %v747, 0.0
      %v780 = vmax.f32 %v748, 0.0
      %v781 = vmax.f32 %v749, 0.0
      %v782 = vmax.f32 %v750, 0.0
      %v783 = vmax.f32 %v751, 0.0
      %v784 = vpack.c.bf16 %v753, %v752
      %v785 = vpack.c.bf16 %v755, %v754
      %v786 = vpack.c.bf16 %v757, %v756
      %v787 = vpack.c.bf16 %v759, %v758
      %v788 = vpack.c.bf16 %v761, %v760
      %v789 = vpack.c.bf16 %v763, %v762
      %v790 = vpack.c.bf16 %v765, %v764
      %v791 = vpack.c.bf16 %v767, %v766
      %v792 = vpack.c.bf16 %v769, %v768
      %v793 = vpack.c.bf16 %v771, %v770
      %v794 = vpack.c.bf16 %v773, %v772
      %v795 = vpack.c.bf16 %v775, %v774
      %v796 = vpack.c.bf16 %v777, %v776
      %v797 = vpack.c.bf16 %v779, %v778
      %v798 = vpack.c.bf16 %v781, %v780
      %v799 = vpack.c.bf16 %v783, %v782
      %v816 = vunpack.c.l.b16 %v784
      %v817 = vunpack.c.h.b16 %v784
      %v818 = vunpack.c.l.b16 %v785
      %v819 = vunpack.c.h.b16 %v785
      %v820 = vunpack.c.l.b16 %v786
      %v821 = vunpack.c.h.b16 %v786
      %v822 = vunpack.c.l.b16 %v787
      %v823 = vunpack.c.h.b16 %v787
      %v824 = vunpack.c.l.b16 %v788
      %v825 = vunpack.c.h.b16 %v788
      %v826 = vunpack.c.l.b16 %v789
      %v827 = vunpack.c.h.b16 %v789
      %v828 = vunpack.c.l.b16 %v790
      %v829 = vunpack.c.h.b16 %v790
      %v830 = vunpack.c.l.b16 %v791
      %v831 = vunpack.c.h.b16 %v791
      %v832 = vunpack.c.l.b16 %v792
      %v833 = vunpack.c.h.b16 %v792
      %v834 = vunpack.c.l.b16 %v793
      %v835 = vunpack.c.h.b16 %v793
      %v836 = vunpack.c.l.b16 %v794
      %v837 = vunpack.c.h.b16 %v794
      %v838 = vunpack.c.l.b16 %v795
      %v839 = vunpack.c.h.b16 %v795
      %v840 = vunpack.c.l.b16 %v796
      %v841 = vunpack.c.h.b16 %v796
      %v842 = vunpack.c.l.b16 %v797
      %v843 = vunpack.c.h.b16 %v797
      %v844 = vunpack.c.l.b16 %v798
      %v845 = vunpack.c.h.b16 %v798
      %v846 = vunpack.c.l.b16 %v799
      %v847 = vunpack.c.h.b16 %v799
      %v848 = vpack.c.b16 %v816, %v816
      %v849 = vpack.c.b16 %v817, %v817
      %v850 = vpack.c.b16 %v818, %v818
      %v851 = vpack.c.b16 %v819, %v819
      %v852 = vpack.c.b16 %v820, %v820
      %v853 = vpack.c.b16 %v821, %v821
      %v854 = vpack.c.b16 %v822, %v822
      %v855 = vpack.c.b16 %v823, %v823
      %v856 = vpack.c.b16 %v824, %v824
      %v857 = vpack.c.b16 %v825, %v825
      %v858 = vpack.c.b16 %v826, %v826
      %v859 = vpack.c.b16 %v827, %v827
      %v860 = vpack.c.b16 %v828, %v828
      %v861 = vpack.c.b16 %v829, %v829
      %v862 = vpack.c.b16 %v830, %v830
      %v863 = vpack.c.b16 %v831, %v831
      %v864 = vpack.c.b16 %v832, %v832
      %v865 = vpack.c.b16 %v833, %v833
      %v866 = vpack.c.b16 %v834, %v834
      %v867 = vpack.c.b16 %v835, %v835
      %v868 = vpack.c.b16 %v836, %v836
      %v869 = vpack.c.b16 %v837, %v837
      %v870 = vpack.c.b16 %v838, %v838
      %v871 = vpack.c.b16 %v839, %v839
      %v872 = vpack.c.b16 %v840, %v840
      %v873 = vpack.c.b16 %v841, %v841
      %v874 = vpack.c.b16 %v842, %v842
      %v875 = vpack.c.b16 %v843, %v843
      %v876 = vpack.c.b16 %v844, %v844
      %v877 = vpack.c.b16 %v845, %v845
      %v878 = vpack.c.b16 %v846, %v846
      %v879 = vpack.c.b16 %v847, %v847
      %vm912 = vcmask 519168
      %913 = vst.msk [vmem:[%s202] sm:$0xf] %vm912, %v848
      %914 = vst.msk [vmem:[%s202 + $0x4] sm:$0xf] %vm912, %v849
      %915 = vst.msk [vmem:[%s202 + $0x8] sm:$0xf] %vm912, %v850
      %916 = vst.msk [vmem:[%s202 + $0xc] sm:$0xf] %vm912, %v851
      %917 = vst.msk [vmem:[%s202 + $0x10] sm:$0xf] %vm912, %v852
      %918 = vst.msk [vmem:[%s202 + $0x14] sm:$0xf] %vm912, %v853
      %919 = vst.msk [vmem:[%s202 + $0x18] sm:$0xf] %vm912, %v854
      %920 = vst.msk [vmem:[%s202 + $0x1c] sm:$0xf] %vm912, %v855
      %921 = vst.msk [vmem:[%s202 + $0x20] sm:$0xf] %vm912, %v856
      %922 = vst.msk [vmem:[%s202 + $0x24] sm:$0xf] %vm912, %v857
      %923 = vst.msk [vmem:[%s202 + $0x28] sm:$0xf] %vm912, %v858
      %924 = vst.msk [vmem:[%s202 + $0x2c] sm:$0xf] %vm912, %v859
      %925 = vst.msk [vmem:[%s202 + $0x30] sm:$0xf] %vm912, %v860
      %926 = vst.msk [vmem:[%s202 + $0x34] sm:$0xf] %vm912, %v861
      %927 = vst.msk [vmem:[%s202 + $0x38] sm:$0xf] %vm912, %v862
      %928 = vst.msk [vmem:[%s202 + $0x3c] sm:$0xf] %vm912, %v863
      %929 = vst.msk [vmem:[%s202 + $0x40] sm:$0xf] %vm912, %v864
      %930 = vst.msk [vmem:[%s202 + $0x44] sm:$0xf] %vm912, %v865
      %931 = vst.msk [vmem:[%s202 + $0x48] sm:$0xf] %vm912, %v866
      %932 = vst.msk [vmem:[%s202 + $0x4c] sm:$0xf] %vm912, %v867
      %933 = vst.msk [vmem:[%s202 + $0x50] sm:$0xf] %vm912, %v868
      %934 = vst.msk [vmem:[%s202 + $0x54] sm:$0xf] %vm912, %v869
      %935 = vst.msk [vmem:[%s202 + $0x58] sm:$0xf] %vm912, %v870
      %936 = vst.msk [vmem:[%s202 + $0x5c] sm:$0xf] %vm912, %v871
      %937 = vst.msk [vmem:[%s202 + $0x60] sm:$0xf] %vm912, %v872
      %938 = vst.msk [vmem:[%s202 + $0x64] sm:$0xf] %vm912, %v873
      %939 = vst.msk [vmem:[%s202 + $0x68] sm:$0xf] %vm912, %v874
      %940 = vst.msk [vmem:[%s202 + $0x6c] sm:$0xf] %vm912, %v875
      %941 = vst.msk [vmem:[%s202 + $0x70] sm:$0xf] %vm912, %v876
      %942 = vst.msk [vmem:[%s202 + $0x74] sm:$0xf] %vm912, %v877
      %943 = vst.msk [vmem:[%s202 + $0x78] sm:$0xf] %vm912, %v878
      %944 = vst.msk [vmem:[%s202 + $0x7c] sm:$0xf] %vm912, %v879
      %s945 = smul.u32 32, %s15
      %p946 = scmp.lt.s32.totalorder %s945, 63
      %s947 = scalar_select %p946, %s945, 63
      %s948 = smul.addr %s947, 4
      %s949 = scalar_lea.vmem %s4, %s948
      // Predicated region
      $region37: #{tpu_custom_call.1} parent=35 // pred_check
        %p950 = pneg %p122
      $region38: #{tpu_custom_call.1} parent=35 // pred_check_branch
        %952 = sbr.rel (%p950) target = $region40
      $region39: #{tpu_custom_call.1} parent=35 // pred_region
        %s953 = smul.u32 32, %s15
      $region40: #{tpu_custom_call.1} parent=35 // pred_fallthru
        _
    $region36: #{tpu_custom_call.1} parent=5 // pred_fallthru
      _
    %p954 = scmp.le.s32.totalorder 2, %s10
    // Predicated region
    $region41: #{tpu_custom_call.1} parent=5 // pred_check
      %p955 = pneg %p954
    $region42: #{tpu_custom_call.1} parent=5 // pred_check_branch
      %957 = sbr.rel (%p955) target = $region44
    $region43: #{tpu_custom_call.1} parent=5 // pred_region
      %s958 = ssub.s32 %s10, 2
      // Predicated region
      $region45: #{tpu_custom_call.1} parent=43 // pred_check
        %p959 = pneg %p128
      $region46: #{tpu_custom_call.1} parent=43 // pred_check_branch
        %961 = sbr.rel (%p959) target = $region48
      $region47: #{tpu_custom_call.1} parent=43 // pred_region
        %s962 = smul.u32 32, %s16
        %p963 = scmp.lt.s32.totalorder %s962, 63
        %s964 = scalar_select %p963, %s962, 63
        %s965 = smul.addr %s964, 4
        %s966 = scalar_lea.vmem %s4, %s965
      $region48: #{tpu_custom_call.1} parent=43 // pred_fallthru
        _
    $region44: #{tpu_custom_call.1} parent=5 // pred_fallthru
      _
  $region6: #{tpu_custom_call.1} parent=0 // loop_footer
    %s14 = sadd.s32 1, %s10
  $region7: #{tpu_custom_call.1} parent=0 // loop_footer_branch
    %9 = sbr.rel target = $region3
  $region8: #{tpu_custom_call.1} parent=0 // loop_exit
    _

</llo_original>
